<compile_context>
chip_gen: v6e
topology: v6e:2x2x1
jax: 0.10.0
libtpu: 0.0.40
codegen_flags: <defaults>
</compile_context>

<pallas_src>
import functools

import jax
import jax.numpy as jnp
from jax.experimental import pallas as pl
from jax.experimental.pallas import tpu as pltpu

# Model hyperparameters (synthetic, small)
EMBED_LEN = 16    # embedLen
HIDDEN_NUM = 32   # hiddenNum  (4H = 128 -> exactly one vreg lane-width)
BATCH = 2
SEQ = 8
BPAD = 8          # batch padded to one full sublane group


def _lstm_kernel(x_ref, p_ref, hc_ref, *, bpad, seq, embed, hidden):
    """Full LSTM forward in-kernel.

    x_ref  : (S*bpad, E)   time-major input, batch zero-padded to `bpad` rows
    p_ref  : (E+H+1, 4H)   packed params: rows [0:E]=W_ih^T, [E:E+H]=W_hh^T,
                            [E+H]=b_ih+b_hh
    hc_ref : (2, bpad, H)  row 0 = h_n (padded), row 1 = c_n (padded)
    """
    x = x_ref[...]                                         # (S*bpad, E) f32
    wih = p_ref[0:embed, :]                                # (E, 4H) f32
    # W_hh cast to bf16 once, outside the recurrence (single-pass MXU).
    whh_bf16 = p_ref[embed:embed + hidden, :].astype(jnp.bfloat16)   # (H, 4H)
    b = p_ref[embed + hidden:embed + hidden + 1, :]        # (1, 4H) f32

    # Input projection for all timesteps at once on the MXU (full f32, one
    # shot, off the serial chain): (S*bpad, E) @ (E, 4H) -> (S*bpad, 4H).
    x_proj = jnp.dot(x, wih, preferred_element_type=jnp.float32) + b

    h = jnp.zeros((bpad, hidden), jnp.float32)
    c = jnp.zeros((bpad, hidden), jnp.float32)

    # Fully unrolled recurrence; every gx slice is an aligned (8,128) tile.
    for t in range(seq):
        gx = x_proj[t * bpad:(t + 1) * bpad, :]            # (8, 4H) aligned
        gh = jnp.dot(h.astype(jnp.bfloat16), whh_bf16,
                     preferred_element_type=jnp.float32)   # single-pass MXU
        gates = gx + gh                                    # (8, 128) f32

        # One tanh covers all three sigmoid gates (sigmoid(x)=0.5*tanh(x/2)+0.5),
        # one more covers the g gate; static lane slices pick i/f/g/o
        # (PyTorch gate order).
        sig = 0.5 * jnp.tanh(0.5 * gates) + 0.5
        tng = jnp.tanh(gates)
        i = sig[:, 0 * hidden:1 * hidden]
        f = sig[:, 1 * hidden:2 * hidden]
        g = tng[:, 2 * hidden:3 * hidden]
        o = sig[:, 3 * hidden:4 * hidden]

        c = f * c + i * g
        h = o * jnp.tanh(c)

    # Two direct row stores -- no lane-axis concatenate in the epilogue.
    hc_ref[0, :, :] = h
    hc_ref[1, :, :] = c


def prepare_encoder_params(w_ih, w_hh, b_ih, b_hh):
    """One-time parameter prep (hoisted out of the per-call forward):
    pack [W_ih^T ; W_hh^T ; b_ih+b_hh] into a single (E+H+1, 4H) f32 operand.
    With E and E+H multiples of 8, all kernel-side slices are sublane-aligned."""
    wih_t = jnp.transpose(w_ih).astype(jnp.float32)          # (E, 4H)
    whh_t = jnp.transpose(w_hh).astype(jnp.float32)          # (H, 4H)
    b = (b_ih + b_hh).reshape(1, -1).astype(jnp.float32)     # (1, 4H)
    return jnp.concatenate([wih_t, whh_t, b], axis=0)        # (E+H+1, 4H)


@jax.jit
def encoder_forward(x, params_packed):
    """x: (B, S, E) float32, params_packed from prepare_encoder_params.
    Returns (h_n, c_n), each (1, B, H) (PyTorch convention)."""
    B, S, E = x.shape
    H = params_packed.shape[1] // 4
    assert B <= BPAD, "for B > 8 add a parallel grid axis over batch blocks"

    # Per-call layout glue only: time-major, batch padded to 8 sublanes.
    x_tm = jnp.transpose(x, (1, 0, 2))                       # (S, B, E)
    x_tm = jnp.pad(x_tm, ((0, 0), (0, BPAD - B), (0, 0)))    # (S, 8, E)
    x_tm = x_tm.reshape(S * BPAD, E)                         # (S*8, E)

    vmem = pl.BlockSpec(memory_space=pltpu.MemorySpace.VMEM)
    hc = pl.pallas_call(
        functools.partial(_lstm_kernel, bpad=BPAD, seq=S, embed=E, hidden=H),
        out_shape=jax.ShapeDtypeStruct((2, BPAD, H), jnp.float32),
        in_specs=[vmem, vmem],
        out_specs=vmem,
        compiler_params=pltpu.CompilerParams(
            vmem_limit_bytes=16 * 1024 * 1024),
    )(x_tm, params_packed)

    h_n = hc[0, :B, :][None, :, :]   # (1, B, H)
    c_n = hc[1, :B, :][None, :, :]   # (1, B, H)
    return h_n, c_n


# ----------------------------- references ---------------------------------

def _lstm_reference_f32(x, w_ih, w_hh, b_ih, b_hh):
    """Pure-JAX reference matching PyTorch nn.LSTM f32 forward (spec semantics)."""
    B, S, E = x.shape
    H = w_hh.shape[1]
    h = jnp.zeros((B, H), jnp.float32)
    c = jnp.zeros((B, H), jnp.float32)
    for t in range(S):
        gates = x[:, t, :] @ w_ih.T + b_ih + h @ w_hh.T + b_hh
        i = jax.nn.sigmoid(gates[:, 0 * H:1 * H])
        f = jax.nn.sigmoid(gates[:, 1 * H:2 * H])
        g = jnp.tanh(gates[:, 2 * H:3 * H])
        o = jax.nn.sigmoid(gates[:, 3 * H:4 * H])
        c = f * c + i * g
        h = o * jnp.tanh(c)
    return h[None, :, :], c[None, :, :]


def _lstm_reference_kernel_numerics(x, w_ih, w_hh, b_ih, b_hh):
    """Reference mirroring the kernel's numeric choices (bf16 operands for the
    recurrent dot with f32 accumulation, tanh-form sigmoid) -> tight check."""
    B, S, E = x.shape
    H = w_hh.shape[1]
    wih_t = jnp.transpose(w_ih)
    whh_bf16 = jnp.transpose(w_hh).astype(jnp.bfloat16)
    b = b_ih + b_hh
    h = jnp.zeros((B, H), jnp.float32)
    c = jnp.zeros((B, H), jnp.float32)
    for t in range(S):
        gx = jnp.dot(x[:, t, :], wih_t, preferred_element_type=jnp.float32) + b
        gh = jnp.dot(h.astype(jnp.bfloat16), whh_bf16,
                     preferred_element_type=jnp.float32)
        gates = gx + gh
        sig = 0.5 * jnp.tanh(0.5 * gates) + 0.5
        tng = jnp.tanh(gates)
        i = sig[:, 0 * H:1 * H]
        f = sig[:, 1 * H:2 * H]
        g = tng[:, 2 * H:3 * H]
        o = sig[:, 3 * H:4 * H]
        c = f * c + i * g
        h = o * jnp.tanh(c)
    return h[None, :, :], c[None, :, :]


def _init_lstm_params(key, embed_len, hidden_num):
    """Deterministic init mirroring PyTorch nn.LSTM: U(-1/sqrt(H), 1/sqrt(H))."""
    k1, k2, k3, k4 = jax.random.split(key, 4)
    bound = 1.0 / jnp.sqrt(jnp.float32(hidden_num))
    w_ih = jax.random.uniform(k1, (4 * hidden_num, embed_len), jnp.float32, -bound, bound)
    w_hh = jax.random.uniform(k2, (4 * hidden_num, hidden_num), jnp.float32, -bound, bound)
    b_ih = jax.random.uniform(k3, (4 * hidden_num,), jnp.float32, -bound, bound)
    b_hh = jax.random.uniform(k4, (4 * hidden_num,), jnp.float32, -bound, bound)
    return w_ih, w_hh, b_ih, b_hh


if __name__ == "__main__":
    key = jax.random.PRNGKey(0)
    k_x, k_p = jax.random.split(key)

    x = jax.random.normal(k_x, (BATCH, SEQ, EMBED_LEN), jnp.float32)
    w_ih, w_hh, b_ih, b_hh = _init_lstm_params(k_p, EMBED_LEN, HIDDEN_NUM)

    params = prepare_encoder_params(w_ih, w_hh, b_ih, b_hh)   # one-time prep
    h_n, c_n = encoder_forward(x, params)
    jax.block_until_ready((h_n, c_n))

    assert h_n.shape == (1, BATCH, HIDDEN_NUM), h_n.shape
    assert c_n.shape == (1, BATCH, HIDDEN_NUM), c_n.shape
    assert jnp.all(jnp.isfinite(h_n)) and jnp.all(jnp.isfinite(c_n))

    # Tight check: reference using the same numeric choices as the kernel
    # (bf16 recurrent-dot operands, f32 accumulation, tanh-form sigmoid).
    h_t, c_t = _lstm_reference_kernel_numerics(x, w_ih, w_hh, b_ih, b_hh)
    assert jnp.allclose(h_n, h_t, rtol=1e-3, atol=1e-3), float(jnp.max(jnp.abs(h_n - h_t)))
    assert jnp.allclose(c_n, c_t, rtol=1e-3, atol=1e-3), float(jnp.max(jnp.abs(c_n - c_t)))

    # Loose sanity check against the strict-f32 PyTorch-semantics reference
    # (tolerance relaxed because the recurrent dot intentionally uses bf16
    # inputs for single-pass MXU latency, per the performance review).
    h_r, c_r = _lstm_reference_f32(x, w_ih, w_hh, b_ih, b_hh)
    assert jnp.allclose(h_n, h_r, rtol=5e-2, atol=5e-2), float(jnp.max(jnp.abs(h_n - h_r)))
    assert jnp.allclose(c_n, c_r, rtol=5e-2, atol=5e-2), float(jnp.max(jnp.abs(c_n - c_r)))

    print("KERNEL_OK")
</pallas_src>

<mosaic_0001>
module attributes {stable_mosaic.version = 11 : i64} {
  func.func @_lstm_kernel(%arg0: memref<64x16xf32, #tpu.memory_space<vmem>>, %arg1: memref<49x128xf32, #tpu.memory_space<vmem>>, %arg2: memref<2x8x32xf32, #tpu.memory_space<vmem>>) attributes {dimension_semantics = [], scalar_prefetch = 0 : i64, scratch_operands = 0 : i64, tpu.core_type = #tpu.core_type<tc>} {
    %c0 = arith.constant 0 : index
    %c0_0 = arith.constant 0 : index
    %0 = vector.load %arg0[%c0, %c0_0] : memref<64x16xf32, #tpu.memory_space<vmem>>, vector<64x16xf32>
    %c0_1 = arith.constant 0 : index
    %c0_2 = arith.constant 0 : index
    %1 = vector.load %arg1[%c0_1, %c0_2] : memref<49x128xf32, #tpu.memory_space<vmem>>, vector<16x128xf32>
    %c16 = arith.constant 16 : index
    %c0_3 = arith.constant 0 : index
    %2 = vector.load %arg1[%c16, %c0_3] : memref<49x128xf32, #tpu.memory_space<vmem>>, vector<32x128xf32>
    %3 = arith.truncf %2 : vector<32x128xf32> to vector<32x128xbf16>
    %c48 = arith.constant 48 : index
    %c0_4 = arith.constant 0 : index
    %4 = vector.load %arg1[%c48, %c0_4] : memref<49x128xf32, #tpu.memory_space<vmem>>, vector<1x128xf32>
    %cst = arith.constant dense<0.000000e+00> : vector<64x128xf32>
    %5 = tpu.matmul %0, %1, %cst {dimension_numbers = #tpu.dot_dimension_numbers<[1], [0], [0], [1], [0, 0, 1, 1], [], []>} : vector<64x16xf32>, vector<16x128xf32>, vector<64x128xf32> -> vector<64x128xf32>
    %6 = vector.broadcast %4 : vector<1x128xf32> to vector<64x128xf32>
    %7 = arith.addf %5, %6 : vector<64x128xf32>
    %cst_5 = arith.constant 0.000000e+00 : f32
    %8 = vector.broadcast %cst_5 : f32 to vector<8x32xf32>
    %cst_6 = arith.constant 0.000000e+00 : f32
    %9 = vector.broadcast %cst_6 : f32 to vector<8x32xf32>
    %10 = vector.extract_strided_slice %7 {offsets = [0, 0], sizes = [8, 128], strides = [1, 1]} : vector<64x128xf32> to vector<8x128xf32>
    %11 = arith.truncf %8 : vector<8x32xf32> to vector<8x32xbf16>
    %cst_7 = arith.constant dense<0.000000e+00> : vector<8x128xf32>
    %12 = tpu.matmul %11, %3, %cst_7 {dimension_numbers = #tpu.dot_dimension_numbers<[1], [0], [0], [1], [0, 0, 1, 1], [], []>} : vector<8x32xbf16>, vector<32x128xbf16>, vector<8x128xf32> -> vector<8x128xf32>
    %13 = arith.addf %10, %12 : vector<8x128xf32>
    %cst_8 = arith.constant 5.000000e-01 : f32
    %14 = vector.broadcast %cst_8 : f32 to vector<8x128xf32>
    %15 = arith.mulf %14, %13 : vector<8x128xf32>
    %16 = math.tanh %15 : vector<8x128xf32>
    %cst_9 = arith.constant 5.000000e-01 : f32
    %17 = vector.broadcast %cst_9 : f32 to vector<8x128xf32>
    %18 = arith.mulf %17, %16 : vector<8x128xf32>
    %cst_10 = arith.constant 5.000000e-01 : f32
    %19 = vector.broadcast %cst_10 : f32 to vector<8x128xf32>
    %20 = arith.addf %18, %19 : vector<8x128xf32>
    %21 = math.tanh %13 : vector<8x128xf32>
    %22 = vector.extract_strided_slice %20 {offsets = [0, 0], sizes = [8, 32], strides = [1, 1]} : vector<8x128xf32> to vector<8x32xf32>
    %23 = vector.extract_strided_slice %20 {offsets = [0, 32], sizes = [8, 32], strides = [1, 1]} : vector<8x128xf32> to vector<8x32xf32>
    %24 = vector.extract_strided_slice %21 {offsets = [0, 64], sizes = [8, 32], strides = [1, 1]} : vector<8x128xf32> to vector<8x32xf32>
    %25 = vector.extract_strided_slice %20 {offsets = [0, 96], sizes = [8, 32], strides = [1, 1]} : vector<8x128xf32> to vector<8x32xf32>
    %26 = arith.mulf %23, %9 : vector<8x32xf32>
    %27 = arith.mulf %22, %24 : vector<8x32xf32>
    %28 = arith.addf %26, %27 : vector<8x32xf32>
    %29 = math.tanh %28 : vector<8x32xf32>
    %30 = arith.mulf %25, %29 : vector<8x32xf32>
    %31 = vector.extract_strided_slice %7 {offsets = [8, 0], sizes = [8, 128], strides = [1, 1]} : vector<64x128xf32> to vector<8x128xf32>
    %32 = arith.truncf %30 : vector<8x32xf32> to vector<8x32xbf16>
    %cst_11 = arith.constant dense<0.000000e+00> : vector<8x128xf32>
    %33 = tpu.matmul %32, %3, %cst_11 {dimension_numbers = #tpu.dot_dimension_numbers<[1], [0], [0], [1], [0, 0, 1, 1], [], []>} : vector<8x32xbf16>, vector<32x128xbf16>, vector<8x128xf32> -> vector<8x128xf32>
    %34 = arith.addf %31, %33 : vector<8x128xf32>
    %cst_12 = arith.constant 5.000000e-01 : f32
    %35 = vector.broadcast %cst_12 : f32 to vector<8x128xf32>
    %36 = arith.mulf %35, %34 : vector<8x128xf32>
    %37 = math.tanh %36 : vector<8x128xf32>
    %cst_13 = arith.constant 5.000000e-01 : f32
    %38 = vector.broadcast %cst_13 : f32 to vector<8x128xf32>
    %39 = arith.mulf %38, %37 : vector<8x128xf32>
    %cst_14 = arith.constant 5.000000e-01 : f32
    %40 = vector.broadcast %cst_14 : f32 to vector<8x128xf32>
    %41 = arith.addf %39, %40 : vector<8x128xf32>
    %42 = math.tanh %34 : vector<8x128xf32>
    %43 = vector.extract_strided_slice %41 {offsets = [0, 0], sizes = [8, 32], strides = [1, 1]} : vector<8x128xf32> to vector<8x32xf32>
    %44 = vector.extract_strided_slice %41 {offsets = [0, 32], sizes = [8, 32], strides = [1, 1]} : vector<8x128xf32> to vector<8x32xf32>
    %45 = vector.extract_strided_slice %42 {offsets = [0, 64], sizes = [8, 32], strides = [1, 1]} : vector<8x128xf32> to vector<8x32xf32>
    %46 = vector.extract_strided_slice %41 {offsets = [0, 96], sizes = [8, 32], strides = [1, 1]} : vector<8x128xf32> to vector<8x32xf32>
    %47 = arith.mulf %44, %28 : vector<8x32xf32>
    %48 = arith.mulf %43, %45 : vector<8x32xf32>
    %49 = arith.addf %47, %48 : vector<8x32xf32>
    %50 = math.tanh %49 : vector<8x32xf32>
    %51 = arith.mulf %46, %50 : vector<8x32xf32>
    %52 = vector.extract_strided_slice %7 {offsets = [16, 0], sizes = [8, 128], strides = [1, 1]} : vector<64x128xf32> to vector<8x128xf32>
    %53 = arith.truncf %51 : vector<8x32xf32> to vector<8x32xbf16>
    %cst_15 = arith.constant dense<0.000000e+00> : vector<8x128xf32>
    %54 = tpu.matmul %53, %3, %cst_15 {dimension_numbers = #tpu.dot_dimension_numbers<[1], [0], [0], [1], [0, 0, 1, 1], [], []>} : vector<8x32xbf16>, vector<32x128xbf16>, vector<8x128xf32> -> vector<8x128xf32>
    %55 = arith.addf %52, %54 : vector<8x128xf32>
    %cst_16 = arith.constant 5.000000e-01 : f32
    %56 = vector.broadcast %cst_16 : f32 to vector<8x128xf32>
    %57 = arith.mulf %56, %55 : vector<8x128xf32>
    %58 = math.tanh %57 : vector<8x128xf32>
    %cst_17 = arith.constant 5.000000e-01 : f32
    %59 = vector.broadcast %cst_17 : f32 to vector<8x128xf32>
    %60 = arith.mulf %59, %58 : vector<8x128xf32>
    %cst_18 = arith.constant 5.000000e-01 : f32
    %61 = vector.broadcast %cst_18 : f32 to vector<8x128xf32>
    %62 = arith.addf %60, %61 : vector<8x128xf32>
    %63 = math.tanh %55 : vector<8x128xf32>
    %64 = vector.extract_strided_slice %62 {offsets = [0, 0], sizes = [8, 32], strides = [1, 1]} : vector<8x128xf32> to vector<8x32xf32>
    %65 = vector.extract_strided_slice %62 {offsets = [0, 32], sizes = [8, 32], strides = [1, 1]} : vector<8x128xf32> to vector<8x32xf32>
    %66 = vector.extract_strided_slice %63 {offsets = [0, 64], sizes = [8, 32], strides = [1, 1]} : vector<8x128xf32> to vector<8x32xf32>
    %67 = vector.extract_strided_slice %62 {offsets = [0, 96], sizes = [8, 32], strides = [1, 1]} : vector<8x128xf32> to vector<8x32xf32>
    %68 = arith.mulf %65, %49 : vector<8x32xf32>
    %69 = arith.mulf %64, %66 : vector<8x32xf32>
    %70 = arith.addf %68, %69 : vector<8x32xf32>
    %71 = math.tanh %70 : vector<8x32xf32>
    %72 = arith.mulf %67, %71 : vector<8x32xf32>
    %73 = vector.extract_strided_slice %7 {offsets = [24, 0], sizes = [8, 128], strides = [1, 1]} : vector<64x128xf32> to vector<8x128xf32>
    %74 = arith.truncf %72 : vector<8x32xf32> to vector<8x32xbf16>
    %cst_19 = arith.constant dense<0.000000e+00> : vector<8x128xf32>
    %75 = tpu.matmul %74, %3, %cst_19 {dimension_numbers = #tpu.dot_dimension_numbers<[1], [0], [0], [1], [0, 0, 1, 1], [], []>} : vector<8x32xbf16>, vector<32x128xbf16>, vector<8x128xf32> -> vector<8x128xf32>
    %76 = arith.addf %73, %75 : vector<8x128xf32>
    %cst_20 = arith.constant 5.000000e-01 : f32
    %77 = vector.broadcast %cst_20 : f32 to vector<8x128xf32>
    %78 = arith.mulf %77, %76 : vector<8x128xf32>
    %79 = math.tanh %78 : vector<8x128xf32>
    %cst_21 = arith.constant 5.000000e-01 : f32
    %80 = vector.broadcast %cst_21 : f32 to vector<8x128xf32>
    %81 = arith.mulf %80, %79 : vector<8x128xf32>
    %cst_22 = arith.constant 5.000000e-01 : f32
    %82 = vector.broadcast %cst_22 : f32 to vector<8x128xf32>
    %83 = arith.addf %81, %82 : vector<8x128xf32>
    %84 = math.tanh %76 : vector<8x128xf32>
    %85 = vector.extract_strided_slice %83 {offsets = [0, 0], sizes = [8, 32], strides = [1, 1]} : vector<8x128xf32> to vector<8x32xf32>
    %86 = vector.extract_strided_slice %83 {offsets = [0, 32], sizes = [8, 32], strides = [1, 1]} : vector<8x128xf32> to vector<8x32xf32>
    %87 = vector.extract_strided_slice %84 {offsets = [0, 64], sizes = [8, 32], strides = [1, 1]} : vector<8x128xf32> to vector<8x32xf32>
    %88 = vector.extract_strided_slice %83 {offsets = [0, 96], sizes = [8, 32], strides = [1, 1]} : vector<8x128xf32> to vector<8x32xf32>
    %89 = arith.mulf %86, %70 : vector<8x32xf32>
    %90 = arith.mulf %85, %87 : vector<8x32xf32>
    %91 = arith.addf %89, %90 : vector<8x32xf32>
    %92 = math.tanh %91 : vector<8x32xf32>
    %93 = arith.mulf %88, %92 : vector<8x32xf32>
    %94 = vector.extract_strided_slice %7 {offsets = [32, 0], sizes = [8, 128], strides = [1, 1]} : vector<64x128xf32> to vector<8x128xf32>
    %95 = arith.truncf %93 : vector<8x32xf32> to vector<8x32xbf16>
    %cst_23 = arith.constant dense<0.000000e+00> : vector<8x128xf32>
    %96 = tpu.matmul %95, %3, %cst_23 {dimension_numbers = #tpu.dot_dimension_numbers<[1], [0], [0], [1], [0, 0, 1, 1], [], []>} : vector<8x32xbf16>, vector<32x128xbf16>, vector<8x128xf32> -> vector<8x128xf32>
    %97 = arith.addf %94, %96 : vector<8x128xf32>
    %cst_24 = arith.constant 5.000000e-01 : f32
    %98 = vector.broadcast %cst_24 : f32 to vector<8x128xf32>
    %99 = arith.mulf %98, %97 : vector<8x128xf32>
    %100 = math.tanh %99 : vector<8x128xf32>
    %cst_25 = arith.constant 5.000000e-01 : f32
    %101 = vector.broadcast %cst_25 : f32 to vector<8x128xf32>
    %102 = arith.mulf %101, %100 : vector<8x128xf32>
    %cst_26 = arith.constant 5.000000e-01 : f32
    %103 = vector.broadcast %cst_26 : f32 to vector<8x128xf32>
    %104 = arith.addf %102, %103 : vector<8x128xf32>
    %105 = math.tanh %97 : vector<8x128xf32>
    %106 = vector.extract_strided_slice %104 {offsets = [0, 0], sizes = [8, 32], strides = [1, 1]} : vector<8x128xf32> to vector<8x32xf32>
    %107 = vector.extract_strided_slice %104 {offsets = [0, 32], sizes = [8, 32], strides = [1, 1]} : vector<8x128xf32> to vector<8x32xf32>
    %108 = vector.extract_strided_slice %105 {offsets = [0, 64], sizes = [8, 32], strides = [1, 1]} : vector<8x128xf32> to vector<8x32xf32>
    %109 = vector.extract_strided_slice %104 {offsets = [0, 96], sizes = [8, 32], strides = [1, 1]} : vector<8x128xf32> to vector<8x32xf32>
    %110 = arith.mulf %107, %91 : vector<8x32xf32>
    %111 = arith.mulf %106, %108 : vector<8x32xf32>
    %112 = arith.addf %110, %111 : vector<8x32xf32>
    %113 = math.tanh %112 : vector<8x32xf32>
    %114 = arith.mulf %109, %113 : vector<8x32xf32>
    %115 = vector.extract_strided_slice %7 {offsets = [40, 0], sizes = [8, 128], strides = [1, 1]} : vector<64x128xf32> to vector<8x128xf32>
    %116 = arith.truncf %114 : vector<8x32xf32> to vector<8x32xbf16>
    %cst_27 = arith.constant dense<0.000000e+00> : vector<8x128xf32>
    %117 = tpu.matmul %116, %3, %cst_27 {dimension_numbers = #tpu.dot_dimension_numbers<[1], [0], [0], [1], [0, 0, 1, 1], [], []>} : vector<8x32xbf16>, vector<32x128xbf16>, vector<8x128xf32> -> vector<8x128xf32>
    %118 = arith.addf %115, %117 : vector<8x128xf32>
    %cst_28 = arith.constant 5.000000e-01 : f32
    %119 = vector.broadcast %cst_28 : f32 to vector<8x128xf32>
    %120 = arith.mulf %119, %118 : vector<8x128xf32>
    %121 = math.tanh %120 : vector<8x128xf32>
    %cst_29 = arith.constant 5.000000e-01 : f32
    %122 = vector.broadcast %cst_29 : f32 to vector<8x128xf32>
    %123 = arith.mulf %122, %121 : vector<8x128xf32>
    %cst_30 = arith.constant 5.000000e-01 : f32
    %124 = vector.broadcast %cst_30 : f32 to vector<8x128xf32>
    %125 = arith.addf %123, %124 : vector<8x128xf32>
    %126 = math.tanh %118 : vector<8x128xf32>
    %127 = vector.extract_strided_slice %125 {offsets = [0, 0], sizes = [8, 32], strides = [1, 1]} : vector<8x128xf32> to vector<8x32xf32>
    %128 = vector.extract_strided_slice %125 {offsets = [0, 32], sizes = [8, 32], strides = [1, 1]} : vector<8x128xf32> to vector<8x32xf32>
    %129 = vector.extract_strided_slice %126 {offsets = [0, 64], sizes = [8, 32], strides = [1, 1]} : vector<8x128xf32> to vector<8x32xf32>
    %130 = vector.extract_strided_slice %125 {offsets = [0, 96], sizes = [8, 32], strides = [1, 1]} : vector<8x128xf32> to vector<8x32xf32>
    %131 = arith.mulf %128, %112 : vector<8x32xf32>
    %132 = arith.mulf %127, %129 : vector<8x32xf32>
    %133 = arith.addf %131, %132 : vector<8x32xf32>
    %134 = math.tanh %133 : vector<8x32xf32>
    %135 = arith.mulf %130, %134 : vector<8x32xf32>
    %136 = vector.extract_strided_slice %7 {offsets = [48, 0], sizes = [8, 128], strides = [1, 1]} : vector<64x128xf32> to vector<8x128xf32>
    %137 = arith.truncf %135 : vector<8x32xf32> to vector<8x32xbf16>
    %cst_31 = arith.constant dense<0.000000e+00> : vector<8x128xf32>
    %138 = tpu.matmul %137, %3, %cst_31 {dimension_numbers = #tpu.dot_dimension_numbers<[1], [0], [0], [1], [0, 0, 1, 1], [], []>} : vector<8x32xbf16>, vector<32x128xbf16>, vector<8x128xf32> -> vector<8x128xf32>
    %139 = arith.addf %136, %138 : vector<8x128xf32>
    %cst_32 = arith.constant 5.000000e-01 : f32
    %140 = vector.broadcast %cst_32 : f32 to vector<8x128xf32>
    %141 = arith.mulf %140, %139 : vector<8x128xf32>
    %142 = math.tanh %141 : vector<8x128xf32>
    %cst_33 = arith.constant 5.000000e-01 : f32
    %143 = vector.broadcast %cst_33 : f32 to vector<8x128xf32>
    %144 = arith.mulf %143, %142 : vector<8x128xf32>
    %cst_34 = arith.constant 5.000000e-01 : f32
    %145 = vector.broadcast %cst_34 : f32 to vector<8x128xf32>
    %146 = arith.addf %144, %145 : vector<8x128xf32>
    %147 = math.tanh %139 : vector<8x128xf32>
    %148 = vector.extract_strided_slice %146 {offsets = [0, 0], sizes = [8, 32], strides = [1, 1]} : vector<8x128xf32> to vector<8x32xf32>
    %149 = vector.extract_strided_slice %146 {offsets = [0, 32], sizes = [8, 32], strides = [1, 1]} : vector<8x128xf32> to vector<8x32xf32>
    %150 = vector.extract_strided_slice %147 {offsets = [0, 64], sizes = [8, 32], strides = [1, 1]} : vector<8x128xf32> to vector<8x32xf32>
    %151 = vector.extract_strided_slice %146 {offsets = [0, 96], sizes = [8, 32], strides = [1, 1]} : vector<8x128xf32> to vector<8x32xf32>
    %152 = arith.mulf %149, %133 : vector<8x32xf32>
    %153 = arith.mulf %148, %150 : vector<8x32xf32>
    %154 = arith.addf %152, %153 : vector<8x32xf32>
    %155 = math.tanh %154 : vector<8x32xf32>
    %156 = arith.mulf %151, %155 : vector<8x32xf32>
    %157 = vector.extract_strided_slice %7 {offsets = [56, 0], sizes = [8, 128], strides = [1, 1]} : vector<64x128xf32> to vector<8x128xf32>
    %158 = arith.truncf %156 : vector<8x32xf32> to vector<8x32xbf16>
    %cst_35 = arith.constant dense<0.000000e+00> : vector<8x128xf32>
    %159 = tpu.matmul %158, %3, %cst_35 {dimension_numbers = #tpu.dot_dimension_numbers<[1], [0], [0], [1], [0, 0, 1, 1], [], []>} : vector<8x32xbf16>, vector<32x128xbf16>, vector<8x128xf32> -> vector<8x128xf32>
    %160 = arith.addf %157, %159 : vector<8x128xf32>
    %cst_36 = arith.constant 5.000000e-01 : f32
    %161 = vector.broadcast %cst_36 : f32 to vector<8x128xf32>
    %162 = arith.mulf %161, %160 : vector<8x128xf32>
    %163 = math.tanh %162 : vector<8x128xf32>
    %cst_37 = arith.constant 5.000000e-01 : f32
    %164 = vector.broadcast %cst_37 : f32 to vector<8x128xf32>
    %165 = arith.mulf %164, %163 : vector<8x128xf32>
    %cst_38 = arith.constant 5.000000e-01 : f32
    %166 = vector.broadcast %cst_38 : f32 to vector<8x128xf32>
    %167 = arith.addf %165, %166 : vector<8x128xf32>
    %168 = math.tanh %160 : vector<8x128xf32>
    %169 = vector.extract_strided_slice %167 {offsets = [0, 0], sizes = [8, 32], strides = [1, 1]} : vector<8x128xf32> to vector<8x32xf32>
    %170 = vector.extract_strided_slice %167 {offsets = [0, 32], sizes = [8, 32], strides = [1, 1]} : vector<8x128xf32> to vector<8x32xf32>
    %171 = vector.extract_strided_slice %168 {offsets = [0, 64], sizes = [8, 32], strides = [1, 1]} : vector<8x128xf32> to vector<8x32xf32>
    %172 = vector.extract_strided_slice %167 {offsets = [0, 96], sizes = [8, 32], strides = [1, 1]} : vector<8x128xf32> to vector<8x32xf32>
    %173 = arith.mulf %170, %154 : vector<8x32xf32>
    %174 = arith.mulf %169, %171 : vector<8x32xf32>
    %175 = arith.addf %173, %174 : vector<8x32xf32>
    %176 = math.tanh %175 : vector<8x32xf32>
    %177 = arith.mulf %172, %176 : vector<8x32xf32>
    %c0_39 = arith.constant 0 : index
    %c0_40 = arith.constant 0 : index
    %c0_41 = arith.constant 0 : index
    %178 = vector.load %arg2[%c0_39, %c0_40, %c0_41] : memref<2x8x32xf32, #tpu.memory_space<vmem>>, vector<1x8x32xf32>
    %179 = vector.shape_cast %178 : vector<1x8x32xf32> to vector<8x32xf32>
    %180 = vector.shape_cast %177 : vector<8x32xf32> to vector<1x8x32xf32>
    tpu.vector_store %arg2[%c0_39, %c0_40, %c0_41], %180 {strides = array<i32>} : memref<2x8x32xf32, #tpu.memory_space<vmem>>, vector<1x8x32xf32>,
    %c1 = arith.constant 1 : index
    %c0_42 = arith.constant 0 : index
    %c0_43 = arith.constant 0 : index
    %181 = vector.load %arg2[%c1, %c0_42, %c0_43] : memref<2x8x32xf32, #tpu.memory_space<vmem>>, vector<1x8x32xf32>
    %182 = vector.shape_cast %181 : vector<1x8x32xf32> to vector<8x32xf32>
    %183 = vector.shape_cast %175 : vector<8x32xf32> to vector<1x8x32xf32>
    tpu.vector_store %arg2[%c1, %c0_42, %c0_43], %183 {strides = array<i32>} : memref<2x8x32xf32, #tpu.memory_space<vmem>>, vector<1x8x32xf32>,
    return
  }
}

</mosaic_0001>

<llo_original>
// kernel: encoder_forward.1
$region0: #{encoder_forward.1}
  #allocation0 [shape = 'u32[]', space=smem, size = 0x4, offset = 0x4, fixed_abs, tag = 'smem constant byte address 0x4 - core index']
  #allocation1 [shape = 'u32[144,128]{1,0:T(1,128)}', space=vmem, size = 0x12000, scoped, tag = 'internal scratch']
  %s0 = inlined_call_operand.vmem [shape: f32[64,16], index: 0, kind: input, shape index: {}]
  %s1 = inlined_call_operand.vmem [shape: f32[49,128], index: 1, kind: input, shape index: {}]
  %s2 = inlined_call_operand.vmem [shape: f32[2,8,32], index: 2, kind: output, shape index: {}]
  %s3 = sld [smem:[#allocation0]]
  $region18: #{encoder_forward.1} parent=0
    _
  %s5 = ssub.s32 1, %s3
  %s6 = scalar_select 0, %s5, %s3
  // Predicated region
  $region2: #{encoder_forward.1} parent=0 // pred_check
    _
  $region3: #{encoder_forward.1} parent=0 // pred_check_branch
    %8 = sbr.rel (0) target = $region5
  $region4: #{encoder_forward.1} parent=0 // pred_region
    _
  $region5: #{encoder_forward.1} parent=0 // pred_fallthru
    _
  // Predicated region
  $region6: #{encoder_forward.1} parent=0 // pred_check
    _
  $region7: #{encoder_forward.1} parent=0 // pred_check_branch
    %10 = sbr.rel (0) target = $region9
  $region8: #{encoder_forward.1} parent=0 // pred_region
    _
  $region9: #{encoder_forward.1} parent=0 // pred_fallthru
    _
  %v12 = vld [vmem:[%s0] sm:$0xff]
  %v13 = vld [vmem:[%s0 + $0x8] sm:$0xff]
  %v14 = vld [vmem:[%s0 + $0x10] sm:$0xff]
  %v15 = vld [vmem:[%s0 + $0x18] sm:$0xff]
  %v16 = vld [vmem:[%s0 + $0x20] sm:$0xff]
  %v17 = vld [vmem:[%s0 + $0x28] sm:$0xff]
  %v18 = vld [vmem:[%s0 + $0x30] sm:$0xff]
  %v19 = vld [vmem:[%s0 + $0x38] sm:$0xff]
  %v20 = vld [vmem:[%s1] sm:$0xff]
  %v21 = vld [vmem:[%s1 + $0x8] sm:$0xff]
  %v22 = vld [vmem:[%s1 + $0x10] sm:$0xff]
  %v23 = vld [vmem:[%s1 + $0x18] sm:$0xff]
  %v24 = vld [vmem:[%s1 + $0x20] sm:$0xff]
  %v25 = vld [vmem:[%s1 + $0x28] sm:$0xff]
  %v26 = vpack.c.bf16 %v23, %v22
  %v27 = vpack.c.bf16 %v25, %v24
  %v28 = vld [vmem:[%s1 + $0x30] sm:$0x1]
  %v29 = vlaneseq
  %v30 = vshrl.u32 %v29, 7
  %v31 = vsub.s32 0, %v30
  %v32 = vrot.slane %v28, %v31
  %vm33 = vcmask 130048
  %v35 = vsel %vm33, %v12, 0
  %v38 = vsel %vm33, %v13, 0
  %v41 = vsel %vm33, %v14, 0
  %v44 = vsel %vm33, %v15, 0
  %v47 = vsel %vm33, %v16, 0
  %v50 = vsel %vm33, %v17, 0
  %v53 = vsel %vm33, %v18, 0
  %v56 = vsel %vm33, %v19, 0
  %58 = vmatprep.subr.mxu0 0.0
  %59 = vmatpush1.msra.mxu0 0.0
  %60 = vmatprep.subr.mxu0 0.0
  %61 = vmatpush1.msra.mxu0 0.0
  %62 = vmatprep.subr.mxu0 0.0
  %63 = vmatpush1.msra.mxu0 0.0
  %64 = vmatprep.subr.mxu0 0.0
  %65 = vmatpush1.msra.mxu0 0.0
  %66 = vmatprep.subr.mxu0 0.0
  %67 = vmatpush1.msra.mxu0 0.0
  %68 = vmatprep.subr.mxu0 0.0
  %69 = vmatpush1.msra.mxu0 0.0
  %70 = vmatprep.subr.mxu0 0.0
  %71 = vmatpush1.msra.mxu0 0.0
  %72 = vmatprep.subr.mxu0 0.0
  %73 = vmatpush1.msra.mxu0 0.0
  %74 = vmatprep.subr.mxu0 0.0
  %75 = vmatpush1.msra.mxu0 0.0
  %76 = vmatprep.subr.mxu0 0.0
  %77 = vmatpush1.msra.mxu0 0.0
  %78 = vmatprep.subr.mxu0 0.0
  %79 = vmatpush1.msra.mxu0 0.0
  %80 = vmatprep.subr.mxu0 0.0
  %81 = vmatpush1.msra.mxu0 0.0
  %82 = vmatprep.subr.mxu0 0.0
  %83 = vmatpush1.msra.mxu0 0.0
  %84 = vmatprep.subr.mxu0 0.0
  %85 = vmatpush1.msra.mxu0 0.0
  %86 = vmatprep.subr.mxu0 0.0
  %87 = vmatpush1.msra.mxu0 %v21
  %88 = vmatprep.subr.mxu0 0.0
  %89 = vmatpush1.msra.mxu0 %v20
  %90 = vmatprep.subr.mxu0 0.0
  %91 = vmatpush2.msra.mxu0 0.0
  %92 = vmatprep.subr.mxu0 0.0
  %93 = vmatpush2.msra.mxu0 0.0
  %94 = vmatprep.subr.mxu0 0.0
  %95 = vmatpush2.msra.mxu0 0.0
  %96 = vmatprep.subr.mxu0 0.0
  %97 = vmatpush2.msra.mxu0 0.0
  %98 = vmatprep.subr.mxu0 0.0
  %99 = vmatpush2.msra.mxu0 0.0
  %100 = vmatprep.subr.mxu0 0.0
  %101 = vmatpush2.msra.mxu0 0.0
  %102 = vmatprep.subr.mxu0 0.0
  %103 = vmatpush2.msra.mxu0 0.0
  %104 = vmatprep.subr.mxu0 0.0
  %105 = vmatpush2.msra.mxu0 0.0
  %106 = vmatprep.subr.mxu0 0.0
  %107 = vmatpush2.msra.mxu0 0.0
  %108 = vmatprep.subr.mxu0 0.0
  %109 = vmatpush2.msra.mxu0 0.0
  %110 = vmatprep.subr.mxu0 0.0
  %111 = vmatpush2.msra.mxu0 0.0
  %112 = vmatprep.subr.mxu0 0.0
  %113 = vmatpush2.msra.mxu0 0.0
  %114 = vmatprep.subr.mxu0 0.0
  %115 = vmatpush2.msra.mxu0 0.0
  %116 = vmatprep.subr.mxu0 0.0
  %117 = vmatpush2.msra.mxu0 0.0
  %118 = vmatprep.subr.mxu0 0.0
  %119 = vmatpush2.msra.mxu0 0.0
  %120 = vmatprep.subr.mxu0 0.0
  %121 = vmatpush2.msra.mxu0 0.0
  %122 = vmatprep.mubr.f32.mxu0 0.0
  %123 = vmatmul.mubr.f32.gmra.mxu0 %v35
  %v124 = vpop.f32.mrf.mxu0
  %v125 = vadd.f32 %v32, %v124
  %v126 = vpop.f32.mrf.mxu0
  %127 = vmatprep.mubr.f32.mxu0 0.0
  %128 = vmatmul.mubr.f32.gmra.mxu0 %v38
  %v129 = vpop.f32.mrf.mxu0
  %v130 = vadd.f32 %v32, %v129
  %v131 = vpop.f32.mrf.mxu0
  %132 = vmatprep.mubr.f32.mxu0 0.0
  %133 = vmatmul.mubr.f32.gmra.mxu0 %v41
  %v134 = vpop.f32.mrf.mxu0
  %v135 = vadd.f32 %v32, %v134
  %v136 = vpop.f32.mrf.mxu0
  %137 = vmatprep.mubr.f32.mxu0 0.0
  %138 = vmatmul.mubr.f32.gmra.mxu0 %v44
  %v139 = vpop.f32.mrf.mxu0
  %v140 = vadd.f32 %v32, %v139
  %v141 = vpop.f32.mrf.mxu0
  %142 = vmatprep.mubr.f32.mxu0 0.0
  %143 = vmatmul.mubr.f32.gmra.mxu0 %v47
  %v144 = vpop.f32.mrf.mxu0
  %v145 = vadd.f32 %v32, %v144
  %v146 = vpop.f32.mrf.mxu0
  %147 = vmatprep.mubr.f32.mxu0 0.0
  %148 = vmatmul.mubr.f32.gmra.mxu0 %v50
  %v149 = vpop.f32.mrf.mxu0
  %v150 = vadd.f32 %v32, %v149
  %v151 = vpop.f32.mrf.mxu0
  %152 = vmatprep.mubr.f32.mxu0 0.0
  %153 = vmatmul.mubr.f32.gmra.mxu0 %v53
  %v154 = vpop.f32.mrf.mxu0
  %v155 = vadd.f32 %v32, %v154
  %v156 = vpop.f32.mrf.mxu0
  %157 = vmatprep.mubr.f32.mxu0 0.0
  %158 = vmatmul.mubr.f32.gmra.mxu0 %v56
  %v159 = vpop.f32.mrf.mxu0
  %v160 = vadd.f32 %v32, %v159
  %v161 = vpop.f32.mrf.mxu0
  %162 = vdwg.mxu0
  %vm163 = vcmask 261120
  %v165 = vsel %vm163, 0, 0
  %167 = vmatprep.subr.bf16.mxu0 0
  %168 = vmatpush1.bf16.msra.mxu0 0
  %169 = vmatprep.subr.bf16.mxu0 0
  %170 = vmatpush1.bf16.msra.mxu0 0
  %171 = vmatprep.subr.bf16.mxu0 0
  %172 = vmatpush1.bf16.msra.mxu0 0
  %173 = vmatprep.subr.bf16.mxu0 0
  %174 = vmatpush1.bf16.msra.mxu0 0
  %175 = vmatprep.subr.bf16.mxu0 0
  %176 = vmatpush1.bf16.msra.mxu0 0
  %177 = vmatprep.subr.bf16.mxu0 0
  %178 = vmatpush1.bf16.msra.mxu0 0
  %179 = vmatprep.subr.bf16.mxu0 0
  %180 = vmatpush1.bf16.msra.mxu0 %v27
  %181 = vmatprep.subr.bf16.mxu0 0
  %182 = vmatpush1.bf16.msra.mxu0 %v26
  %183 = vmatprep.subr.bf16.mxu0 0
  %184 = vmatpush2.bf16.msra.mxu0 0
  %185 = vmatprep.subr.bf16.mxu0 0
  %186 = vmatpush2.bf16.msra.mxu0 0
  %187 = vmatprep.subr.bf16.mxu0 0
  %188 = vmatpush2.bf16.msra.mxu0 0
  %189 = vmatprep.subr.bf16.mxu0 0
  %190 = vmatpush2.bf16.msra.mxu0 0
  %191 = vmatprep.subr.bf16.mxu0 0
  %192 = vmatpush2.bf16.msra.mxu0 0
  %193 = vmatprep.subr.bf16.mxu0 0
  %194 = vmatpush2.bf16.msra.mxu0 0
  %195 = vmatprep.subr.bf16.mxu0 0
  %196 = vmatpush2.bf16.msra.mxu0 0
  %197 = vmatprep.subr.bf16.mxu0 0
  %198 = vmatpush2.bf16.msra.mxu0 0
  %199 = vmatprep.mubr.bf16.mxu0 0
  %200 = vmatmul.mubr.bf16.gmra.mxu0 %v165
  %v201 = vpop.f32.mrf.mxu0
  %v202 = vadd.f32 0.0, %v201
  %v203 = vpop.f32.mrf.mxu0
  %v204 = vpop.f32.mrf.mxu0
  %v205 = vpop.f32.mrf.mxu0
  %206 = vdwg.mxu0
  %v207 = vadd.f32 %v125, %v202
  %v208 = vmul.f32 %v207, 0.5
  %v209 = vtanh.pop %v208
  %v210 = vmul.f32 %v209, 0.5
  %v211 = vadd.f32 %v210, 0.5
  %v212 = vtanh.pop %v207
  %v213 = vmul.f32 %v211, 0.0
  %215 = vrot.lane.b32.xlu0 %v212, 64
  %v216 = vpop.permute.xlu0 %215
  %v218 = vmul.f32 %v211, %v216
  %220 = vrot.lane.b32.xlu0 %v218, 32
  %v221 = vpop.permute.xlu0 %220
  %v223 = vadd.f32 %v213, %v221
  %v224 = vtanh.pop %v223
  %226 = vrot.lane.b32.xlu0 %v224, 64
  %v227 = vpop.permute.xlu0 %226
  %v229 = vmul.f32 %v211, %v227
  %v230 = vpack.c.bf16 %v229, %v229
  %232 = vrot.lane.b32.xlu0 %v230, 32
  %v233 = vpop.permute.xlu0 %232
  %v235 = vsel %vm163, %v233, 0
  %237 = vmatprep.subr.bf16.mxu0 0
  %238 = vmatpush1.bf16.msra.mxu0 0
  %239 = vmatprep.subr.bf16.mxu0 0
  %240 = vmatpush1.bf16.msra.mxu0 0
  %241 = vmatprep.subr.bf16.mxu0 0
  %242 = vmatpush1.bf16.msra.mxu0 0
  %243 = vmatprep.subr.bf16.mxu0 0
  %244 = vmatpush1.bf16.msra.mxu0 0
  %245 = vmatprep.subr.bf16.mxu0 0
  %246 = vmatpush1.bf16.msra.mxu0 0
  %247 = vmatprep.subr.bf16.mxu0 0
  %248 = vmatpush1.bf16.msra.mxu0 0
  %249 = vmatprep.subr.bf16.mxu0 0
  %250 = vmatpush1.bf16.msra.mxu0 %v27
  %251 = vmatprep.subr.bf16.mxu0 0
  %252 = vmatpush1.bf16.msra.mxu0 %v26
  %253 = vmatprep.subr.bf16.mxu0 0
  %254 = vmatpush2.bf16.msra.mxu0 0
  %255 = vmatprep.subr.bf16.mxu0 0
  %256 = vmatpush2.bf16.msra.mxu0 0
  %257 = vmatprep.subr.bf16.mxu0 0
  %258 = vmatpush2.bf16.msra.mxu0 0
  %259 = vmatprep.subr.bf16.mxu0 0
  %260 = vmatpush2.bf16.msra.mxu0 0
  %261 = vmatprep.subr.bf16.mxu0 0
  %262 = vmatpush2.bf16.msra.mxu0 0
  %263 = vmatprep.subr.bf16.mxu0 0
  %264 = vmatpush2.bf16.msra.mxu0 0
  %265 = vmatprep.subr.bf16.mxu0 0
  %266 = vmatpush2.bf16.msra.mxu0 0
  %267 = vmatprep.subr.bf16.mxu0 0
  %268 = vmatpush2.bf16.msra.mxu0 0
  %269 = vmatprep.mubr.bf16.mxu0 0
  %270 = vmatmul.mubr.bf16.gmra.mxu0 %v235
  %v271 = vpop.f32.mrf.mxu0
  %v272 = vadd.f32 0.0, %v271
  %v273 = vpop.f32.mrf.mxu0
  %v274 = vpop.f32.mrf.mxu0
  %v275 = vpop.f32.mrf.mxu0
  %276 = vdwg.mxu0
  %v277 = vadd.f32 %v130, %v272
  %v278 = vmul.f32 %v277, 0.5
  %v279 = vtanh.pop %v278
  %v280 = vmul.f32 %v279, 0.5
  %v281 = vadd.f32 %v280, 0.5
  %v282 = vtanh.pop %v277
  %v283 = vmul.f32 %v281, %v223
  %285 = vrot.lane.b32.xlu0 %v282, 64
  %v286 = vpop.permute.xlu0 %285
  %v288 = vmul.f32 %v281, %v286
  %290 = vrot.lane.b32.xlu0 %v288, 32
  %v291 = vpop.permute.xlu0 %290
  %v293 = vadd.f32 %v283, %v291
  %v294 = vtanh.pop %v293
  %296 = vrot.lane.b32.xlu0 %v294, 64
  %v297 = vpop.permute.xlu0 %296
  %v299 = vmul.f32 %v281, %v297
  %v300 = vpack.c.bf16 %v299, %v299
  %302 = vrot.lane.b32.xlu0 %v300, 32
  %v303 = vpop.permute.xlu0 %302
  %v305 = vsel %vm163, %v303, 0
  %307 = vmatprep.subr.bf16.mxu0 0
  %308 = vmatpush1.bf16.msra.mxu0 0
  %309 = vmatprep.subr.bf16.mxu0 0
  %310 = vmatpush1.bf16.msra.mxu0 0
  %311 = vmatprep.subr.bf16.mxu0 0
  %312 = vmatpush1.bf16.msra.mxu0 0
  %313 = vmatprep.subr.bf16.mxu0 0
  %314 = vmatpush1.bf16.msra.mxu0 0
  %315 = vmatprep.subr.bf16.mxu0 0
  %316 = vmatpush1.bf16.msra.mxu0 0
  %317 = vmatprep.subr.bf16.mxu0 0
  %318 = vmatpush1.bf16.msra.mxu0 0
  %319 = vmatprep.subr.bf16.mxu0 0
  %320 = vmatpush1.bf16.msra.mxu0 %v27
  %321 = vmatprep.subr.bf16.mxu0 0
  %322 = vmatpush1.bf16.msra.mxu0 %v26
  %323 = vmatprep.subr.bf16.mxu0 0
  %324 = vmatpush2.bf16.msra.mxu0 0
  %325 = vmatprep.subr.bf16.mxu0 0
  %326 = vmatpush2.bf16.msra.mxu0 0
  %327 = vmatprep.subr.bf16.mxu0 0
  %328 = vmatpush2.bf16.msra.mxu0 0
  %329 = vmatprep.subr.bf16.mxu0 0
  %330 = vmatpush2.bf16.msra.mxu0 0
  %331 = vmatprep.subr.bf16.mxu0 0
  %332 = vmatpush2.bf16.msra.mxu0 0
  %333 = vmatprep.subr.bf16.mxu0 0
  %334 = vmatpush2.bf16.msra.mxu0 0
  %335 = vmatprep.subr.bf16.mxu0 0
  %336 = vmatpush2.bf16.msra.mxu0 0
  %337 = vmatprep.subr.bf16.mxu0 0
  %338 = vmatpush2.bf16.msra.mxu0 0
  %339 = vmatprep.mubr.bf16.mxu0 0
  %340 = vmatmul.mubr.bf16.gmra.mxu0 %v305
  %v341 = vpop.f32.mrf.mxu0
  %v342 = vadd.f32 0.0, %v341
  %v343 = vpop.f32.mrf.mxu0
  %v344 = vpop.f32.mrf.mxu0
  %v345 = vpop.f32.mrf.mxu0
  %346 = vdwg.mxu0
  %v347 = vadd.f32 %v135, %v342
  %v348 = vmul.f32 %v347, 0.5
  %v349 = vtanh.pop %v348
  %v350 = vmul.f32 %v349, 0.5
  %v351 = vadd.f32 %v350, 0.5
  %v352 = vtanh.pop %v347
  %v353 = vmul.f32 %v351, %v293
  %355 = vrot.lane.b32.xlu0 %v352, 64
  %v356 = vpop.permute.xlu0 %355
  %v358 = vmul.f32 %v351, %v356
  %360 = vrot.lane.b32.xlu0 %v358, 32
  %v361 = vpop.permute.xlu0 %360
  %v363 = vadd.f32 %v353, %v361
  %v364 = vtanh.pop %v363
  %366 = vrot.lane.b32.xlu0 %v364, 64
  %v367 = vpop.permute.xlu0 %366
  %v369 = vmul.f32 %v351, %v367
  %v370 = vpack.c.bf16 %v369, %v369
  %372 = vrot.lane.b32.xlu0 %v370, 32
  %v373 = vpop.permute.xlu0 %372
  %v375 = vsel %vm163, %v373, 0
  %377 = vmatprep.subr.bf16.mxu0 0
  %378 = vmatpush1.bf16.msra.mxu0 0
  %379 = vmatprep.subr.bf16.mxu0 0
  %380 = vmatpush1.bf16.msra.mxu0 0
  %381 = vmatprep.subr.bf16.mxu0 0
  %382 = vmatpush1.bf16.msra.mxu0 0
  %383 = vmatprep.subr.bf16.mxu0 0
  %384 = vmatpush1.bf16.msra.mxu0 0
  %385 = vmatprep.subr.bf16.mxu0 0
  %386 = vmatpush1.bf16.msra.mxu0 0
  %387 = vmatprep.subr.bf16.mxu0 0
  %388 = vmatpush1.bf16.msra.mxu0 0
  %389 = vmatprep.subr.bf16.mxu0 0
  %390 = vmatpush1.bf16.msra.mxu0 %v27
  %391 = vmatprep.subr.bf16.mxu0 0
  %392 = vmatpush1.bf16.msra.mxu0 %v26
  %393 = vmatprep.subr.bf16.mxu0 0
  %394 = vmatpush2.bf16.msra.mxu0 0
  %395 = vmatprep.subr.bf16.mxu0 0
  %396 = vmatpush2.bf16.msra.mxu0 0
  %397 = vmatprep.subr.bf16.mxu0 0
  %398 = vmatpush2.bf16.msra.mxu0 0
  %399 = vmatprep.subr.bf16.mxu0 0
  %400 = vmatpush2.bf16.msra.mxu0 0
  %401 = vmatprep.subr.bf16.mxu0 0
  %402 = vmatpush2.bf16.msra.mxu0 0
  %403 = vmatprep.subr.bf16.mxu0 0
  %404 = vmatpush2.bf16.msra.mxu0 0
  %405 = vmatprep.subr.bf16.mxu0 0
  %406 = vmatpush2.bf16.msra.mxu0 0
  %407 = vmatprep.subr.bf16.mxu0 0
  %408 = vmatpush2.bf16.msra.mxu0 0
  %409 = vmatprep.mubr.bf16.mxu0 0
  %410 = vmatmul.mubr.bf16.gmra.mxu0 %v375
  %v411 = vpop.f32.mrf.mxu0
  %v412 = vadd.f32 0.0, %v411
  %v413 = vpop.f32.mrf.mxu0
  %v414 = vpop.f32.mrf.mxu0
  %v415 = vpop.f32.mrf.mxu0
  %416 = vdwg.mxu0
  %v417 = vadd.f32 %v140, %v412
  %v418 = vmul.f32 %v417, 0.5
  %v419 = vtanh.pop %v418
  %v420 = vmul.f32 %v419, 0.5
  %v421 = vadd.f32 %v420, 0.5
  %v422 = vtanh.pop %v417
  %v423 = vmul.f32 %v421, %v363
  %425 = vrot.lane.b32.xlu0 %v422, 64
  %v426 = vpop.permute.xlu0 %425
  %v428 = vmul.f32 %v421, %v426
  %430 = vrot.lane.b32.xlu0 %v428, 32
  %v431 = vpop.permute.xlu0 %430
  %v433 = vadd.f32 %v423, %v431
  %v434 = vtanh.pop %v433
  %436 = vrot.lane.b32.xlu0 %v434, 64
  %v437 = vpop.permute.xlu0 %436
  %v439 = vmul.f32 %v421, %v437
  %v440 = vpack.c.bf16 %v439, %v439
  %442 = vrot.lane.b32.xlu0 %v440, 32
  %v443 = vpop.permute.xlu0 %442
  %v445 = vsel %vm163, %v443, 0
  %447 = vmatprep.subr.bf16.mxu0 0
  %448 = vmatpush1.bf16.msra.mxu0 0
  %449 = vmatprep.subr.bf16.mxu0 0
  %450 = vmatpush1.bf16.msra.mxu0 0
  %451 = vmatprep.subr.bf16.mxu0 0
  %452 = vmatpush1.bf16.msra.mxu0 0
  %453 = vmatprep.subr.bf16.mxu0 0
  %454 = vmatpush1.bf16.msra.mxu0 0
  %455 = vmatprep.subr.bf16.mxu0 0
  %456 = vmatpush1.bf16.msra.mxu0 0
  %457 = vmatprep.subr.bf16.mxu0 0
  %458 = vmatpush1.bf16.msra.mxu0 0
  %459 = vmatprep.subr.bf16.mxu0 0
  %460 = vmatpush1.bf16.msra.mxu0 %v27
  %461 = vmatprep.subr.bf16.mxu0 0
  %462 = vmatpush1.bf16.msra.mxu0 %v26
  %463 = vmatprep.subr.bf16.mxu0 0
  %464 = vmatpush2.bf16.msra.mxu0 0
  %465 = vmatprep.subr.bf16.mxu0 0
  %466 = vmatpush2.bf16.msra.mxu0 0
  %467 = vmatprep.subr.bf16.mxu0 0
  %468 = vmatpush2.bf16.msra.mxu0 0
  %469 = vmatprep.subr.bf16.mxu0 0
  %470 = vmatpush2.bf16.msra.mxu0 0
  %471 = vmatprep.subr.bf16.mxu0 0
  %472 = vmatpush2.bf16.msra.mxu0 0
  %473 = vmatprep.subr.bf16.mxu0 0
  %474 = vmatpush2.bf16.msra.mxu0 0
  %475 = vmatprep.subr.bf16.mxu0 0
  %476 = vmatpush2.bf16.msra.mxu0 0
  %477 = vmatprep.subr.bf16.mxu0 0
  %478 = vmatpush2.bf16.msra.mxu0 0
  %479 = vmatprep.mubr.bf16.mxu0 0
  %480 = vmatmul.mubr.bf16.gmra.mxu0 %v445
  %v481 = vpop.f32.mrf.mxu0
  %v482 = vadd.f32 0.0, %v481
  %v483 = vpop.f32.mrf.mxu0
  %v484 = vpop.f32.mrf.mxu0
  %v485 = vpop.f32.mrf.mxu0
  %486 = vdwg.mxu0
  %v487 = vadd.f32 %v145, %v482
  %v488 = vmul.f32 %v487, 0.5
  %v489 = vtanh.pop %v488
  %v490 = vmul.f32 %v489, 0.5
  %v491 = vadd.f32 %v490, 0.5
  %v492 = vtanh.pop %v487
  %v493 = vmul.f32 %v491, %v433
  %495 = vrot.lane.b32.xlu0 %v492, 64
  %v496 = vpop.permute.xlu0 %495
  %v498 = vmul.f32 %v491, %v496
  %500 = vrot.lane.b32.xlu0 %v498, 32
  %v501 = vpop.permute.xlu0 %500
  %v503 = vadd.f32 %v493, %v501
  %v504 = vtanh.pop %v503
  %506 = vrot.lane.b32.xlu0 %v504, 64
  %v507 = vpop.permute.xlu0 %506
  %v509 = vmul.f32 %v491, %v507
  %v510 = vpack.c.bf16 %v509, %v509
  %512 = vrot.lane.b32.xlu0 %v510, 32
  %v513 = vpop.permute.xlu0 %512
  %v515 = vsel %vm163, %v513, 0
  %517 = vmatprep.subr.bf16.mxu0 0
  %518 = vmatpush1.bf16.msra.mxu0 0
  %519 = vmatprep.subr.bf16.mxu0 0
  %520 = vmatpush1.bf16.msra.mxu0 0
  %521 = vmatprep.subr.bf16.mxu0 0
  %522 = vmatpush1.bf16.msra.mxu0 0
  %523 = vmatprep.subr.bf16.mxu0 0
  %524 = vmatpush1.bf16.msra.mxu0 0
  %525 = vmatprep.subr.bf16.mxu0 0
  %526 = vmatpush1.bf16.msra.mxu0 0
  %527 = vmatprep.subr.bf16.mxu0 0
  %528 = vmatpush1.bf16.msra.mxu0 0
  %529 = vmatprep.subr.bf16.mxu0 0
  %530 = vmatpush1.bf16.msra.mxu0 %v27
  %531 = vmatprep.subr.bf16.mxu0 0
  %532 = vmatpush1.bf16.msra.mxu0 %v26
  %533 = vmatprep.subr.bf16.mxu0 0
  %534 = vmatpush2.bf16.msra.mxu0 0
  %535 = vmatprep.subr.bf16.mxu0 0
  %536 = vmatpush2.bf16.msra.mxu0 0
  %537 = vmatprep.subr.bf16.mxu0 0
  %538 = vmatpush2.bf16.msra.mxu0 0
  %539 = vmatprep.subr.bf16.mxu0 0
  %540 = vmatpush2.bf16.msra.mxu0 0
  %541 = vmatprep.subr.bf16.mxu0 0
  %542 = vmatpush2.bf16.msra.mxu0 0
  %543 = vmatprep.subr.bf16.mxu0 0
  %544 = vmatpush2.bf16.msra.mxu0 0
  %545 = vmatprep.subr.bf16.mxu0 0
  %546 = vmatpush2.bf16.msra.mxu0 0
  %547 = vmatprep.subr.bf16.mxu0 0
  %548 = vmatpush2.bf16.msra.mxu0 0
  %549 = vmatprep.mubr.bf16.mxu0 0
  %550 = vmatmul.mubr.bf16.gmra.mxu0 %v515
  %v551 = vpop.f32.mrf.mxu0
  %v552 = vadd.f32 0.0, %v551
  %v553 = vpop.f32.mrf.mxu0
  %v554 = vpop.f32.mrf.mxu0
  %v555 = vpop.f32.mrf.mxu0
  %556 = vdwg.mxu0
  %v557 = vadd.f32 %v150, %v552
  %v558 = vmul.f32 %v557, 0.5
  %v559 = vtanh.pop %v558
  %v560 = vmul.f32 %v559, 0.5
  %v561 = vadd.f32 %v560, 0.5
  %v562 = vtanh.pop %v557
  %v563 = vmul.f32 %v561, %v503
  %565 = vrot.lane.b32.xlu0 %v562, 64
  %v566 = vpop.permute.xlu0 %565
  %v568 = vmul.f32 %v561, %v566
  %570 = vrot.lane.b32.xlu0 %v568, 32
  %v571 = vpop.permute.xlu0 %570
  %v573 = vadd.f32 %v563, %v571
  %v574 = vtanh.pop %v573
  %576 = vrot.lane.b32.xlu0 %v574, 64
  %v577 = vpop.permute.xlu0 %576
  %v579 = vmul.f32 %v561, %v577
  %v580 = vpack.c.bf16 %v579, %v579
  %582 = vrot.lane.b32.xlu0 %v580, 32
  %v583 = vpop.permute.xlu0 %582
  %v585 = vsel %vm163, %v583, 0
  %587 = vmatprep.subr.bf16.mxu0 0
  %588 = vmatpush1.bf16.msra.mxu0 0
  %589 = vmatprep.subr.bf16.mxu0 0
  %590 = vmatpush1.bf16.msra.mxu0 0
  %591 = vmatprep.subr.bf16.mxu0 0
  %592 = vmatpush1.bf16.msra.mxu0 0
  %593 = vmatprep.subr.bf16.mxu0 0
  %594 = vmatpush1.bf16.msra.mxu0 0
  %595 = vmatprep.subr.bf16.mxu0 0
  %596 = vmatpush1.bf16.msra.mxu0 0
  %597 = vmatprep.subr.bf16.mxu0 0
  %598 = vmatpush1.bf16.msra.mxu0 0
  %599 = vmatprep.subr.bf16.mxu0 0
  %600 = vmatpush1.bf16.msra.mxu0 %v27
  %601 = vmatprep.subr.bf16.mxu0 0
  %602 = vmatpush1.bf16.msra.mxu0 %v26
  %603 = vmatprep.subr.bf16.mxu0 0
  %604 = vmatpush2.bf16.msra.mxu0 0
  %605 = vmatprep.subr.bf16.mxu0 0
  %606 = vmatpush2.bf16.msra.mxu0 0
  %607 = vmatprep.subr.bf16.mxu0 0
  %608 = vmatpush2.bf16.msra.mxu0 0
  %609 = vmatprep.subr.bf16.mxu0 0
  %610 = vmatpush2.bf16.msra.mxu0 0
  %611 = vmatprep.subr.bf16.mxu0 0
  %612 = vmatpush2.bf16.msra.mxu0 0
  %613 = vmatprep.subr.bf16.mxu0 0
  %614 = vmatpush2.bf16.msra.mxu0 0
  %615 = vmatprep.subr.bf16.mxu0 0
  %616 = vmatpush2.bf16.msra.mxu0 0
  %617 = vmatprep.subr.bf16.mxu0 0
  %618 = vmatpush2.bf16.msra.mxu0 0
  %619 = vmatprep.mubr.bf16.mxu0 0
  %620 = vmatmul.mubr.bf16.gmra.mxu0 %v585
  %v621 = vpop.f32.mrf.mxu0
  %v622 = vadd.f32 0.0, %v621
  %v623 = vpop.f32.mrf.mxu0
  %v624 = vpop.f32.mrf.mxu0
  %v625 = vpop.f32.mrf.mxu0
  %626 = vdwg.mxu0
  %v627 = vadd.f32 %v155, %v622
  %v628 = vmul.f32 %v627, 0.5
  %v629 = vtanh.pop %v628
  %v630 = vmul.f32 %v629, 0.5
  %v631 = vadd.f32 %v630, 0.5
  %v632 = vtanh.pop %v627
  %v633 = vmul.f32 %v631, %v573
  %635 = vrot.lane.b32.xlu0 %v632, 64
  %v636 = vpop.permute.xlu0 %635
  %v638 = vmul.f32 %v631, %v636
  %640 = vrot.lane.b32.xlu0 %v638, 32
  %v641 = vpop.permute.xlu0 %640
  %v643 = vadd.f32 %v633, %v641
  %v644 = vtanh.pop %v643
  %646 = vrot.lane.b32.xlu0 %v644, 64
  %v647 = vpop.permute.xlu0 %646
  %v649 = vmul.f32 %v631, %v647
  %v650 = vpack.c.bf16 %v649, %v649
  %652 = vrot.lane.b32.xlu0 %v650, 32
  %v653 = vpop.permute.xlu0 %652
  %v655 = vsel %vm163, %v653, 0
  %657 = vmatprep.subr.bf16.mxu0 0
  %658 = vmatpush1.bf16.msra.mxu0 0
  %659 = vmatprep.subr.bf16.mxu0 0
  %660 = vmatpush1.bf16.msra.mxu0 0
  %661 = vmatprep.subr.bf16.mxu0 0
  %662 = vmatpush1.bf16.msra.mxu0 0
  %663 = vmatprep.subr.bf16.mxu0 0
  %664 = vmatpush1.bf16.msra.mxu0 0
  %665 = vmatprep.subr.bf16.mxu0 0
  %666 = vmatpush1.bf16.msra.mxu0 0
  %667 = vmatprep.subr.bf16.mxu0 0
  %668 = vmatpush1.bf16.msra.mxu0 0
  %669 = vmatprep.subr.bf16.mxu0 0
  %670 = vmatpush1.bf16.msra.mxu0 %v27
  %671 = vmatprep.subr.bf16.mxu0 0
  %672 = vmatpush1.bf16.msra.mxu0 %v26
  %673 = vmatprep.subr.bf16.mxu0 0
  %674 = vmatpush2.bf16.msra.mxu0 0
  %675 = vmatprep.subr.bf16.mxu0 0
  %676 = vmatpush2.bf16.msra.mxu0 0
  %677 = vmatprep.subr.bf16.mxu0 0
  %678 = vmatpush2.bf16.msra.mxu0 0
  %679 = vmatprep.subr.bf16.mxu0 0
  %680 = vmatpush2.bf16.msra.mxu0 0
  %681 = vmatprep.subr.bf16.mxu0 0
  %682 = vmatpush2.bf16.msra.mxu0 0
  %683 = vmatprep.subr.bf16.mxu0 0
  %684 = vmatpush2.bf16.msra.mxu0 0
  %685 = vmatprep.subr.bf16.mxu0 0
  %686 = vmatpush2.bf16.msra.mxu0 0
  %687 = vmatprep.subr.bf16.mxu0 0
  %688 = vmatpush2.bf16.msra.mxu0 0
  %689 = vmatprep.mubr.bf16.mxu0 0
  %690 = vmatmul.mubr.bf16.gmra.mxu0 %v655
  %v691 = vpop.f32.mrf.mxu0
  %v692 = vadd.f32 0.0, %v691
  %v693 = vpop.f32.mrf.mxu0
  %v694 = vpop.f32.mrf.mxu0
  %v695 = vpop.f32.mrf.mxu0
  %696 = vdwg.mxu0
  %v697 = vadd.f32 %v160, %v692
  %v698 = vmul.f32 %v697, 0.5
  %v699 = vtanh.pop %v698
  %v700 = vmul.f32 %v699, 0.5
  %v701 = vadd.f32 %v700, 0.5
  %v702 = vtanh.pop %v697
  %v703 = vmul.f32 %v701, %v643
  %705 = vrot.lane.b32.xlu0 %v702, 64
  %v706 = vpop.permute.xlu0 %705
  %v708 = vmul.f32 %v701, %v706
  %710 = vrot.lane.b32.xlu0 %v708, 32
  %v711 = vpop.permute.xlu0 %710
  %v713 = vadd.f32 %v703, %v711
  %v714 = vtanh.pop %v713
  %716 = vrot.lane.b32.xlu0 %v714, 64
  %v717 = vpop.permute.xlu0 %716
  %v719 = vmul.f32 %v701, %v717
  %721 = vrot.lane.b32.xlu0 %v719, 32
  %v722 = vpop.permute.xlu0 %721
  %724 = vst.msk [vmem:[%s2] sm:$0xff] %vm163, %v722
  %726 = vrot.lane.b32.xlu0 %v713, 96
  %v727 = vpop.permute.xlu0 %726
  %s729 = scalar_lea.vmem %s2, 8
  %730 = vst.msk [vmem:[%s729] sm:$0xff] %vm163, %v727
  // Predicated region
  $region10: #{encoder_forward.1} parent=0 // pred_check
    _
  $region11: #{encoder_forward.1} parent=0 // pred_check_branch
    %732 = sbr.rel (0) target = $region13
  $region12: #{encoder_forward.1} parent=0 // pred_region
    _
  $region13: #{encoder_forward.1} parent=0 // pred_fallthru
    _
  // Predicated region
  $region14: #{encoder_forward.1} parent=0 // pred_check
    _
  $region15: #{encoder_forward.1} parent=0 // pred_check_branch
    %734 = sbr.rel (0) target = $region17
  $region16: #{encoder_forward.1} parent=0 // pred_region
    _
  $region17: #{encoder_forward.1} parent=0 // pred_fallthru
    _

</llo_original>
